<compile_context>
chip_gen: v7x
topology: tpu7x:2x2x1
jax: 0.10.0
libtpu: 0.0.40
codegen_flags: <defaults>
</compile_context>

<pallas_src>
import functools

import jax
import jax.numpy as jnp
from jax import lax
from jax.experimental import pallas as pl
from jax.experimental.pallas import tpu as pltpu


# ---------------------------------------------------------------------------
# Kernels
# ---------------------------------------------------------------------------


def _ffn_kernel_single(x_ref, w1_ref, b1_ref, w2_ref, b2_ref, o_ref):
    """Single reduction step (tk == dff): no accumulator scratch needed."""
    xb = x_ref[...].astype(jnp.bfloat16)
    h = jnp.dot(xb, w1_ref[...].astype(jnp.bfloat16),
                preferred_element_type=jnp.float32)
    h = jnp.maximum(h + b1_ref[...].astype(jnp.float32), 0.0)
    # dropout: identity in eval/inference mode.
    out = jnp.dot(h.astype(jnp.bfloat16), w2_ref[...].astype(jnp.bfloat16),
                  preferred_element_type=jnp.float32)
    o_ref[...] = (out + b2_ref[...].astype(jnp.float32)).astype(o_ref.dtype)


def _ffn_kernel_acc(x_ref, w1_ref, b1_ref, w2_ref, b2_ref, o_ref, acc_ref, *,
                    dff, tk, ragged_k):
    """One (tm x tn) output tile, reducing over the dff axis (grid axis 2)."""
    k = pl.program_id(2)
    nk = pl.num_programs(2)

    @pl.when(k == 0)
    def _init():
        acc_ref[...] = jnp.zeros_like(acc_ref)

    xb = x_ref[...].astype(jnp.bfloat16)
    h = jnp.dot(xb, w1_ref[...].astype(jnp.bfloat16),
                preferred_element_type=jnp.float32)
    h = jnp.maximum(h + b1_ref[...].astype(jnp.float32), 0.0)
    # dropout: identity in eval/inference mode.

    w2 = w2_ref[...].astype(jnp.bfloat16)
    if ragged_k:
        # Last k block may extend past dff: zero the invalid h columns and
        # W2 rows so padded garbage (possibly NaN) cannot reach the acc.
        valid = dff - k * tk
        col = lax.broadcasted_iota(jnp.int32, h.shape, 1)
        h = jnp.where(col < valid, h, 0.0)
        row = lax.broadcasted_iota(jnp.int32, w2.shape, 0)
        w2 = jnp.where(row < valid, w2, jnp.zeros_like(w2))

    acc_ref[...] += jnp.dot(h.astype(jnp.bfloat16), w2,
                            preferred_element_type=jnp.float32)

    @pl.when(k == nk - 1)
    def _finalize():
        o_ref[...] = (acc_ref[...]
                      + b2_ref[...].astype(jnp.float32)).astype(o_ref.dtype)


# ---------------------------------------------------------------------------
# Tile selection helpers (trace-time Python)
# ---------------------------------------------------------------------------


def _device_kind():
    try:
        return jax.devices()[0].device_kind.lower()
    except Exception:
        return ""


def _is_v7x(kind):
    return "7" in kind


def _vmem_limit_bytes():
    """Scoped VMEM limit with headroom for Mosaic internal scratch."""
    cap = None
    try:
        cap = pltpu.get_tpu_info().vmem_capacity_bytes
    except Exception:
        cap = None
    if cap is None:
        cap = (64 if _is_v7x(_device_kind()) else 128) * 1024 * 1024
    if cap <= 64 * 1024 * 1024:          # v7x: 64 MiB physical per TC
        return 52 * 1024 * 1024
    return 100 * 1024 * 1024             # v5e / v6e: 128 MiB parts


def _default_tm():
    """Row tile large enough to be MXU-bound even when weights are streamed."""
    kind = _device_kind()
    if "v6" in kind or "trillium" in kind:
        return 1024        # v6e: ~918 TF/s vs ~1.4 TB/s  -> need tm >~ 650
    if "v5" in kind:
        return 512         # v5e roofline ~240 FLOPs/byte
    return 512             # v7x (and default): ~310 FLOPs/byte


def _choose_tk(d_model, dff, tn, w_itemsize, budget_bytes):
    """dff reduction tile.

    Full dff (weights resident, one reduction step) if the double-buffered
    W1/W2 blocks fit the budget; otherwise the largest 256-multiple divisor
    of dff that fits (128-multiple fallback); otherwise the largest budget-
    fitting 256-multiple (ragged last block, masked in-kernel).
    """
    per_tk = 2 * (d_model + tn) * w_itemsize      # double-buffered W1 + W2 slices
    if dff * per_tk <= budget_bytes:
        return dff
    max_tk = min(dff, max(256, (budget_bytes // per_tk) // 256 * 256))
    for g in (256, 128):
        tk = (max_tk // g) * g
        while tk >= g:
            if dff % tk == 0:
                return tk
            tk -= g
    return max_tk


# ---------------------------------------------------------------------------
# Public entry point
# ---------------------------------------------------------------------------


@functools.partial(jax.jit, static_argnames=("tm", "tn", "tk", "out_dtype"))
def ffn_forward(x, w1, b1, w2, b2, *, tm=None, tn=None, tk=None, out_dtype=None):
    """x: [B, S, d_model] -> [B, S, d_model].

    Weights are expected (in, out) layout; keep them bf16 at rest for best
    performance (they are cast to bf16 inside the kernel either way).
    """
    B, S, d_model = x.shape
    dff = w1.shape[1]
    M = B * S
    out_dtype = x.dtype if out_dtype is None else jnp.dtype(out_dtype)
    out_isz = jnp.dtype(out_dtype).itemsize

    x2d = x.reshape(M, d_model)
    b1r = b1.reshape(1, dff)
    b2r = b2.reshape(1, d_model)

    # ---- tile selection ----------------------------------------------------
    vmem_limit = _vmem_limit_bytes()
    avail = vmem_limit - 4 * 1024 * 1024          # headroom for Mosaic scratch

    if tm is None:
        tm = _default_tm()
    tm = min(int(tm), M)
    if tm < M:
        g = 128 if tm >= 128 else 8
        tm = max(g, (tm // g) * g)
    x_vmem = 2 * tm * d_model * x2d.dtype.itemsize        # double-buffered x tile

    if tn is None:
        per_col = tm * (4 + 2 * out_isz)                   # f32 acc + 2x out tile
        tn_budget = max((avail - x_vmem) // 3, 2 * 1024 * 1024)
        if d_model * per_col <= tn_budget:
            tn = d_model
        else:
            tn = min(d_model, max(256, (tn_budget // per_col) // 256 * 256))
        # v7x has 2 TensorCores: for small-M (single row tile) split the output
        # columns so both cores get a "parallel" tile instead of idling one.
        if (tn == d_model and pl.cdiv(M, tm) == 1 and d_model >= 512
                and d_model % 256 == 0 and _is_v7x(_device_kind())):
            tn = d_model // 2
    tn = int(tn)
    out_vmem = tm * tn * (4 + 2 * out_isz)

    if tk is None:
        w_budget = max(avail - x_vmem - out_vmem, 2 * 1024 * 1024)
        tk = _choose_tk(d_model, dff, tn, w1.dtype.itemsize, w_budget)
    tk = int(tk)

    nm, nj, nk = pl.cdiv(M, tm), pl.cdiv(d_model, tn), pl.cdiv(dff, tk)
    grid = (nm, nj, nk)
    ragged_k = (dff % tk) != 0

    # ---- kernel / scratch selection ----------------------------------------
    if nk == 1:
        kernel = _ffn_kernel_single
        scratch_shapes = []
    else:
        kernel = functools.partial(_ffn_kernel_acc, dff=dff, tk=tk,
                                   ragged_k=ragged_k)
        scratch_shapes = [pltpu.VMEM((tm, tn), jnp.float32)]

    # ---- advisory cost estimate (accounts for weight re-streaming) ---------
    w1_bytes = w1.size * w1.dtype.itemsize
    w2_bytes = w2.size * w2.dtype.itemsize
    w1_streams = 1 if nk == 1 else nm * nj
    w2_streams = 1 if (nk == 1 and nj == 1) else nm
    cost = pl.CostEstimate(
        flops=4 * M * d_model * dff,           # two matmuls, 2*M*dm*dff each
        transcendentals=0,
        bytes_accessed=(x2d.size * x2d.dtype.itemsize
                        + M * d_model * out_isz
                        + w1_streams * w1_bytes + w2_streams * w2_bytes
                        + (b1r.size + b2r.size) * b1r.dtype.itemsize),
    )

    out2d = pl.pallas_call(
        kernel,
        out_shape=jax.ShapeDtypeStruct((M, d_model), out_dtype),
        grid_spec=pltpu.PrefetchScalarGridSpec(
            num_scalar_prefetch=0,
            grid=grid,
            in_specs=[
                pl.BlockSpec((tm, d_model), lambda i, j, k: (i, 0)),   # x rows
                pl.BlockSpec((d_model, tk), lambda i, j, k: (0, k)),   # W1 slice
                pl.BlockSpec((1, tk),       lambda i, j, k: (0, k)),   # b1 slice
                pl.BlockSpec((tk, tn),      lambda i, j, k: (k, j)),   # W2 slice
                pl.BlockSpec((1, tn),       lambda i, j, k: (0, j)),   # b2 slice
            ],
            out_specs=pl.BlockSpec((tm, tn), lambda i, j, k: (i, j)),
            scratch_shapes=scratch_shapes,
        ),
        compiler_params=pltpu.CompilerParams(
            dimension_semantics=("parallel", "parallel", "arbitrary"),
            vmem_limit_bytes=vmem_limit,
        ),
        cost_estimate=cost,
    )(x2d, w1, b1r, w2, b2r)

    return out2d.reshape(B, S, d_model)


# ---------------------------------------------------------------------------
# Parameter init (mirrors nn.Linear's uniform(-1/sqrt(in), 1/sqrt(in)))
# ---------------------------------------------------------------------------


def init_ffn_params(key, d_model, dff, dtype=jnp.float32):
    k1, k2, k3, k4 = jax.random.split(key, 4)
    lim1 = 1.0 / jnp.sqrt(d_model)
    lim2 = 1.0 / jnp.sqrt(dff)
    # stored as (in, out) == PyTorch weight.T
    w1 = jax.random.uniform(k1, (d_model, dff), dtype, -lim1, lim1)
    b1 = jax.random.uniform(k2, (1, dff), dtype, -lim1, lim1)
    w2 = jax.random.uniform(k3, (dff, d_model), dtype, -lim2, lim2)
    b2 = jax.random.uniform(k4, (1, d_model), dtype, -lim2, lim2)
    return w1, b1, w2, b2


if __name__ == "__main__":
    # Small shapes consistent with the module: batch=2, seq=8, d_model=32, dff=128
    B, S, d_model, dff = 2, 8, 32, 128
    key = jax.random.PRNGKey(0)
    kx, kp = jax.random.split(key)

    x = jax.random.normal(kx, (B, S, d_model), jnp.float32)
    w1, b1, w2, b2 = init_ffn_params(kp, d_model, dff)   # f32 master copy

    # Weights kept bf16 at rest (cast ONCE, outside the hot path); biases f32.
    w1b = jax.block_until_ready(w1.astype(jnp.bfloat16))
    w2b = jax.block_until_ready(w2.astype(jnp.bfloat16))

    out = jax.block_until_ready(ffn_forward(x, w1b, b1, w2b, b2))
    assert out.shape == (B, S, d_model)

    # Reference mirroring the kernel numerics (bf16 matmul inputs, f32 accumulate).
    xb = x.reshape(-1, d_model).astype(jnp.bfloat16)
    h = jnp.maximum(
        jnp.dot(xb, w1b, preferred_element_type=jnp.float32) + b1, 0.0)
    ref = (jnp.dot(h.astype(jnp.bfloat16), w2b,
                   preferred_element_type=jnp.float32) + b2).reshape(B, S, d_model)
    assert jnp.allclose(out, ref, atol=1e-3, rtol=1e-3), "mismatch vs bf16 reference"

    # Loose sanity check against the pure-f32 PyTorch-equivalent math.
    ref32 = (jnp.maximum(x.reshape(-1, d_model) @ w1 + b1, 0.0) @ w2
             + b2).reshape(B, S, d_model)
    assert jnp.allclose(out, ref32, atol=5e-2, rtol=5e-2), "mismatch vs f32 reference"

    print("KERNEL_OK")
</pallas_src>

<mosaic_0001>
module attributes {stable_mosaic.version = 11 : i64} {
  func.func @_ffn_kernel_single(%arg0: i32, %arg1: i32, %arg2: i32, %arg3: memref<16x32xf32, #tpu.memory_space<vmem>>, %arg4: memref<32x128xbf16, #tpu.memory_space<vmem>>, %arg5: memref<1x128xf32, #tpu.memory_space<vmem>>, %arg6: memref<128x32xbf16, #tpu.memory_space<vmem>>, %arg7: memref<1x32xf32, #tpu.memory_space<vmem>>, %arg8: memref<16x32xf32, #tpu.memory_space<vmem>>) attributes {dimension_semantics = [#tpu.dimension_semantics<parallel>, #tpu.dimension_semantics<parallel>, #tpu.dimension_semantics<arbitrary>], iteration_bounds = array<i64: 1, 1, 1>, scalar_prefetch = 0 : i64, scratch_operands = 0 : i64, tpu.core_type = #tpu.core_type<tc>, window_params = [{transform_indices = @transform_0, window_bounds = array<i64: 16, 32>}, {transform_indices = @transform_1, window_bounds = array<i64: 32, 128>}, {transform_indices = @transform_2, window_bounds = array<i64: 1, 128>}, {transform_indices = @transform_3, window_bounds = array<i64: 128, 32>}, {transform_indices = @transform_4, window_bounds = array<i64: 1, 32>}, {transform_indices = @transform_5, window_bounds = array<i64: 16, 32>}]} {
    %c0 = arith.constant 0 : index
    %c0_0 = arith.constant 0 : index
    %0 = vector.load %arg3[%c0, %c0_0] : memref<16x32xf32, #tpu.memory_space<vmem>>, vector<16x32xf32>
    %1 = arith.truncf %0 : vector<16x32xf32> to vector<16x32xbf16>
    %c0_1 = arith.constant 0 : index
    %c0_2 = arith.constant 0 : index
    %2 = vector.load %arg4[%c0_1, %c0_2] : memref<32x128xbf16, #tpu.memory_space<vmem>>, vector<32x128xbf16>
    %cst = arith.constant dense<0.000000e+00> : vector<16x128xf32>
    %3 = tpu.matmul %1, %2, %cst {dimension_numbers = #tpu.dot_dimension_numbers<[1], [0], [0], [1], [0, 0, 1, 1], [], []>} : vector<16x32xbf16>, vector<32x128xbf16>, vector<16x128xf32> -> vector<16x128xf32>
    %c0_3 = arith.constant 0 : index
    %c0_4 = arith.constant 0 : index
    %4 = vector.load %arg5[%c0_3, %c0_4] : memref<1x128xf32, #tpu.memory_space<vmem>>, vector<1x128xf32>
    %5 = vector.broadcast %4 : vector<1x128xf32> to vector<16x128xf32>
    %6 = arith.addf %3, %5 : vector<16x128xf32>
    %cst_5 = arith.constant 0.000000e+00 : f32
    %7 = vector.broadcast %cst_5 : f32 to vector<16x128xf32>
    %8 = arith.maximumf %6, %7 : vector<16x128xf32>
    %9 = arith.truncf %8 : vector<16x128xf32> to vector<16x128xbf16>
    %c0_6 = arith.constant 0 : index
    %c0_7 = arith.constant 0 : index
    %10 = vector.load %arg6[%c0_6, %c0_7] : memref<128x32xbf16, #tpu.memory_space<vmem>>, vector<128x32xbf16>
    %cst_8 = arith.constant dense<0.000000e+00> : vector<16x32xf32>
    %11 = tpu.matmul %9, %10, %cst_8 {dimension_numbers = #tpu.dot_dimension_numbers<[1], [0], [0], [1], [0, 0, 1, 1], [], []>} : vector<16x128xbf16>, vector<128x32xbf16>, vector<16x32xf32> -> vector<16x32xf32>
    %c0_9 = arith.constant 0 : index
    %c0_10 = arith.constant 0 : index
    %12 = vector.load %arg7[%c0_9, %c0_10] : memref<1x32xf32, #tpu.memory_space<vmem>>, vector<1x32xf32>
    %13 = vector.broadcast %12 : vector<1x32xf32> to vector<16x32xf32>
    %14 = arith.addf %11, %13 : vector<16x32xf32>
    %c0_11 = arith.constant 0 : index
    %c0_12 = arith.constant 0 : index
    %15 = vector.load %arg8[%c0_11, %c0_12] : memref<16x32xf32, #tpu.memory_space<vmem>>, vector<16x32xf32>
    tpu.vector_store %arg8[%c0_11, %c0_12], %14 {strides = array<i32>} : memref<16x32xf32, #tpu.memory_space<vmem>>, vector<16x32xf32>,
    return
  }
  func.func @transform_0(%arg0: i32, %arg1: i32, %arg2: i32) -> (i32, i32) {
    %c0_i32 = arith.constant 0 : i32
    %c0_i32_0 = arith.constant 0 : i32
    return %arg0, %c0_i32 : i32, i32
  }
  func.func @transform_1(%arg0: i32, %arg1: i32, %arg2: i32) -> (i32, i32) {
    %c0_i32 = arith.constant 0 : i32
    %c0_i32_0 = arith.constant 0 : i32
    return %c0_i32, %arg2 : i32, i32
  }
  func.func @transform_2(%arg0: i32, %arg1: i32, %arg2: i32) -> (i32, i32) {
    %c0_i32 = arith.constant 0 : i32
    %c0_i32_0 = arith.constant 0 : i32
    return %c0_i32, %arg2 : i32, i32
  }
  func.func @transform_3(%arg0: i32, %arg1: i32, %arg2: i32) -> (i32, i32) {
    %c0_i32 = arith.constant 0 : i32
    return %arg2, %arg1 : i32, i32
  }
  func.func @transform_4(%arg0: i32, %arg1: i32, %arg2: i32) -> (i32, i32) {
    %c0_i32 = arith.constant 0 : i32
    %c0_i32_0 = arith.constant 0 : i32
    return %c0_i32, %arg1 : i32, i32
  }
  func.func @transform_5(%arg0: i32, %arg1: i32, %arg2: i32) -> (i32, i32) {
    %c0_i32 = arith.constant 0 : i32
    return %arg0, %arg1 : i32, i32
  }
}

</mosaic_0001>

<llo_original>
// kernel: ffn_forward.1
$region0: #{ffn_forward.1}
  #allocation0 [shape = 'u32[]', space=smem, size = 0x4, offset = 0x4, fixed_abs, tag = 'smem constant byte address 0x4 - core index']
  #allocation1 [shape = 'u32[144,128]{1,0:T(1,128)}', space=vmem, size = 0x12000, scoped, tag = 'internal scratch']
  %s0 = inlined_call_operand.hbm [shape: f32[16,32], index: 0, kind: input, shape index: {}]
  %s1 = inlined_call_operand.hbm [shape: bf16[32,128], index: 1, kind: input, shape index: {}]
  %s2 = inlined_call_operand.hbm [shape: f32[1,128], index: 2, kind: input, shape index: {}]
  %s3 = inlined_call_operand.hbm [shape: bf16[128,32], index: 3, kind: input, shape index: {}]
  %s4 = inlined_call_operand.hbm [shape: f32[1,32], index: 4, kind: input, shape index: {}]
  %s5 = inlined_call_operand.hbm [shape: f32[16,32], index: 5, kind: output, shape index: {}]
  %s6 = sld [smem:[#allocation0]]
  $region50: #{ffn_forward.1} parent=0
    _
  %s8 = ssub.s32 1, %s6
  %s9 = scalar_select 0, %s8, %s6
  $region1: #{ffn_forward.1} parent=0
    #allocation2 [shape = 'u8[8192]{0}', space=vmem, size = 0x2000, scoped, tag = 'input window, operand 0, single buffered']
    #allocation3 [shape = 's32[1]{0}', space=sflag, size = 0x4, scoped, tag = 'scoped memory for ffn_forward.1']
    #allocation4 [shape = 's32[1]{0}', space=sflag, size = 0x4, scoped, tag = 'scoped memory for ffn_forward.1']
    #allocation5 [shape = 'u8[8192]{0}', space=vmem, size = 0x2000, scoped, tag = 'input window, operand 1, single buffered']
    #allocation6 [shape = 's32[1]{0}', space=sflag, size = 0x4, scoped, tag = 'scoped memory for ffn_forward.1']
    #allocation7 [shape = 'u8[512]{0}', space=vmem, size = 0x400, scoped, tag = 'input window, operand 2, single buffered']
    #allocation8 [shape = 'u8[32768]{0}', space=vmem, size = 0x8000, scoped, tag = 'input window, operand 3, single buffered']
    #allocation9 [shape = 's32[1]{0}', space=sflag, size = 0x4, scoped, tag = 'scoped memory for ffn_forward.1']
    #allocation10 [shape = 'u8[512]{0}', space=vmem, size = 0x400, scoped, tag = 'input window, operand 4, single buffered']
    #allocation11 [shape = 'u8[8192]{0}', space=vmem, size = 0x2000, scoped, tag = 'output window, operand 0, single buffered']
    %10 = vsyncpa [#allocation3], 0
    %11 = vsyncpa [#allocation6], 0
    %12 = vsyncpa [#allocation9], 0
    %13 = vsyncpa [#allocation4], 0
    // Predicated region
    $region2: #{ffn_forward.1} parent=1 // pred_check
      _
    $region3: #{ffn_forward.1} parent=1 // pred_check_branch
      %15 = sbr.rel (0) target = $region5
    $region4: #{ffn_forward.1} parent=1 // pred_region
      %s17 = ssub.s32 256, 256
      %18 = vsyncadd [#allocation3], %s17
      %s19 = sshll.u32 [#allocation2], 4
      %s20 = int_to_ptr.vmem [resolvable:$true] %s19
      %25 = dma.hbm_to_vmem [thread:$0]  %s0, 256, %s20, [#allocation3], 128, 128, 8
    $region5: #{ffn_forward.1} parent=1 // pred_fallthru
      _
    // Predicated region
    $region6: #{ffn_forward.1} parent=1 // pred_check
      _
    $region7: #{ffn_forward.1} parent=1 // pred_check_branch
      %27 = sbr.rel (0) target = $region9
    $region8: #{ffn_forward.1} parent=1 // pred_region
      %s29 = ssub.s32 256, 256
      %30 = vsyncadd [#allocation6], %s29
      %s31 = sshll.u32 [#allocation5], 4
      %s32 = int_to_ptr.vmem [resolvable:$true] %s31
      %37 = dma.hbm_to_vmem [thread:$0]  %s1, 256, %s32, [#allocation6], 64, 64, 4
    $region9: #{ffn_forward.1} parent=1 // pred_fallthru
      _
    // Predicated region
    $region10: #{ffn_forward.1} parent=1 // pred_check
      _
    $region11: #{ffn_forward.1} parent=1 // pred_check_branch
      %39 = sbr.rel (0) target = $region13
    $region12: #{ffn_forward.1} parent=1 // pred_region
      %s41 = ssub.s32 16, 16
      %42 = vsyncadd [#allocation6], %s41
      %s44 = sshll.u32 [#allocation7], 4
      %s45 = int_to_ptr.vmem [resolvable:$true] %s44
      %47 = dma.hbm_to_vmem [thread:$0]  %s2, 16, %s45, [#allocation6]
    $region13: #{ffn_forward.1} parent=1 // pred_fallthru
      _
    // Predicated region
    $region14: #{ffn_forward.1} parent=1 // pred_check
      _
    $region15: #{ffn_forward.1} parent=1 // pred_check_branch
      %49 = sbr.rel (0) target = $region17
    $region16: #{ffn_forward.1} parent=1 // pred_region
      %s51 = ssub.s32 1024, 1024
      %52 = vsyncadd [#allocation9], %s51
      %s53 = sshll.u32 [#allocation8], 4
      %s54 = int_to_ptr.vmem [resolvable:$true] %s53
      %59 = dma.hbm_to_vmem [thread:$0]  %s3, 1024, %s54, [#allocation9], 64, 64, 4
    $region17: #{ffn_forward.1} parent=1 // pred_fallthru
      _
    // Predicated region
    $region18: #{ffn_forward.1} parent=1 // pred_check
      _
    $region19: #{ffn_forward.1} parent=1 // pred_check_branch
      %61 = sbr.rel (0) target = $region21
    $region20: #{ffn_forward.1} parent=1 // pred_region
      %s63 = ssub.s32 16, 16
      %64 = vsyncadd [#allocation9], %s63
      %s66 = sshll.u32 [#allocation10], 4
      %s67 = int_to_ptr.vmem [resolvable:$true] %s66
      %69 = dma.hbm_to_vmem [thread:$0]  %s4, 16, %s67, [#allocation9]
    $region21: #{ffn_forward.1} parent=1 // pred_fallthru
      _
    // Predicated region
    $region22: #{ffn_forward.1} parent=1 // pred_check
      _
    $region23: #{ffn_forward.1} parent=1 // pred_check_branch
      %71 = sbr.rel (0) target = $region25
    $region24: #{ffn_forward.1} parent=1 // pred_region
      %72 = dma.done [#allocation3], 256
    $region25: #{ffn_forward.1} parent=1 // pred_fallthru
      _
    // Predicated region
    $region26: #{ffn_forward.1} parent=1 // pred_check
      _
    $region27: #{ffn_forward.1} parent=1 // pred_check_branch
      %74 = sbr.rel (0) target = $region29
    $region28: #{ffn_forward.1} parent=1 // pred_region
      %75 = dma.done [#allocation6], 256
    $region29: #{ffn_forward.1} parent=1 // pred_fallthru
      _
    // Predicated region
    $region30: #{ffn_forward.1} parent=1 // pred_check
      _
    $region31: #{ffn_forward.1} parent=1 // pred_check_branch
      %77 = sbr.rel (0) target = $region33
    $region32: #{ffn_forward.1} parent=1 // pred_region
      %78 = dma.done [#allocation6], 16
    $region33: #{ffn_forward.1} parent=1 // pred_fallthru
      _
    // Predicated region
    $region34: #{ffn_forward.1} parent=1 // pred_check
      _
    $region35: #{ffn_forward.1} parent=1 // pred_check_branch
      %80 = sbr.rel (0) target = $region37
    $region36: #{ffn_forward.1} parent=1 // pred_region
      %81 = dma.done [#allocation9], 1024
    $region37: #{ffn_forward.1} parent=1 // pred_fallthru
      _
    // Predicated region
    $region38: #{ffn_forward.1} parent=1 // pred_check
      _
    $region39: #{ffn_forward.1} parent=1 // pred_check_branch
      %83 = sbr.rel (0) target = $region41
    $region40: #{ffn_forward.1} parent=1 // pred_region
      %84 = dma.done [#allocation9], 16
    $region41: #{ffn_forward.1} parent=1 // pred_fallthru
      _
    %v86 = vld [vmem:[#allocation2] sm:$0xff]
    %v87 = vld [vmem:[#allocation2 + $0x8] sm:$0xff]
    %v88 = vpack.c.bf16 %v87, %v86
    %v89 = vld [vmem:[#allocation5] sm:$0xf]
    %v90 = vld [vmem:[#allocation5 + $0x4] sm:$0xf]
    %v91 = vld [vmem:[#allocation5 + $0x8] sm:$0xf]
    %v92 = vld [vmem:[#allocation5 + $0xc] sm:$0xf]
    %v93 = vld [vmem:[#allocation7] sm:$0x1]
    %v95 = vlaneseq
    %v96 = vshrl.u32 %v95, 7
    %v97 = vsub.s32 0, %v96
    %v98 = vrot.slane %v93, %v97
    %v104 = vunpack.c.l.b16 %v89
    %v105 = vunpack.c.l.b16 %v90
    %v106 = vunpack.c.l.b16 %v91
    %v107 = vunpack.c.l.b16 %v92
    %v108 = vpack.c.b16 %v105, %v104
    %v109 = vpack.c.b16 %v107, %v106
    %vm112 = vcmask 261120
    %v114 = vsel %vm112, %v88, 0
    %116 = vmatprep.subr.bf16.mxu0 0
    %117 = vmatpush1.bf16.msra.mxu0 %v108
    %118 = vmatprep.subr.bf16.mxu0 0
    %119 = vmatpush1.bf16.msra.mxu0 %v109
    %120 = vmatprep.subr.bf16.mxu0 0
    %121 = vmatpush1.bf16.msra.mxu0 0
    %122 = vmatprep.subr.bf16.mxu0 0
    %123 = vmatpush1.bf16.msra.mxu0 0
    %124 = vmatprep.subr.bf16.mxu0 0
    %125 = vmatpush1.bf16.msra.mxu0 0
    %126 = vmatprep.subr.bf16.mxu0 0
    %127 = vmatpush1.bf16.msra.mxu0 0
    %128 = vmatprep.subr.bf16.mxu0 0
    %129 = vmatpush1.bf16.msra.mxu0 0
    %130 = vmatprep.subr.bf16.mxu0 0
    %131 = vmatpush1.bf16.msra.mxu0 0
    %132 = vmatprep.subr.bf16.mxu0 0
    %133 = vmatpush1.bf16.msra.mxu0 0
    %134 = vmatprep.subr.bf16.mxu0 0
    %135 = vmatpush1.bf16.msra.mxu0 0
    %136 = vmatprep.subr.bf16.mxu0 0
    %137 = vmatpush1.bf16.msra.mxu0 0
    %138 = vmatprep.subr.bf16.mxu0 0
    %139 = vmatpush1.bf16.msra.mxu0 0
    %140 = vmatprep.subr.bf16.mxu0 0
    %141 = vmatpush1.bf16.msra.mxu0 0
    %142 = vmatprep.subr.bf16.mxu0 0
    %143 = vmatpush1.bf16.msra.mxu0 0
    %144 = vmatprep.subr.bf16.mxu0 0
    %145 = vmatpush1.bf16.msra.mxu0 0
    %146 = vmatprep.subr.bf16.mxu0 0
    %147 = vmatpush1.bf16.msra.mxu0 0
    %148 = vmatprep.mubr.bf16.mxu0 0
    %149 = vmatmul.mubr.bf16.gmra.mrb[0].mxu0 %v114
    %v150 = vpop.f32.mrb[0].mxu0
    %v151 = vadd.f32 %v98, %v150
    %v152 = vpop.f32.mrb[0].mxu0
    %v153 = vpop.f32.mrb[0].mxu0
    %v154 = vadd.f32 %v98, %v153
    %v155 = vpop.f32.mrb[0].mxu0
    %156 = vdwg.mxu0
    %v157 = vmax.f32 %v151, 0.0
    %v158 = vmax.f32 %v154, 0.0
    %v159 = vpack.c.bf16 %v158, %v157
    %v160 = vld [vmem:[#allocation8] sm:$0xf]
    %v161 = vld [vmem:[#allocation8 + $0x4] sm:$0xf]
    %v162 = vld [vmem:[#allocation8 + $0x8] sm:$0xf]
    %v163 = vld [vmem:[#allocation8 + $0xc] sm:$0xf]
    %v164 = vld [vmem:[#allocation8 + $0x10] sm:$0xf]
    %v165 = vld [vmem:[#allocation8 + $0x14] sm:$0xf]
    %v166 = vld [vmem:[#allocation8 + $0x18] sm:$0xf]
    %v167 = vld [vmem:[#allocation8 + $0x1c] sm:$0xf]
    %v168 = vld [vmem:[#allocation8 + $0x20] sm:$0xf]
    %v169 = vld [vmem:[#allocation8 + $0x24] sm:$0xf]
    %v170 = vld [vmem:[#allocation8 + $0x28] sm:$0xf]
    %v171 = vld [vmem:[#allocation8 + $0x2c] sm:$0xf]
    %v172 = vld [vmem:[#allocation8 + $0x30] sm:$0xf]
    %v173 = vld [vmem:[#allocation8 + $0x34] sm:$0xf]
    %v174 = vld [vmem:[#allocation8 + $0x38] sm:$0xf]
    %v175 = vld [vmem:[#allocation8 + $0x3c] sm:$0xf]
    %v176 = vld [vmem:[#allocation10] sm:$0x1]
    %v178 = vlaneseq
    %v179 = vshrl.u32 %v178, 7
    %v180 = vsub.s32 0, %v179
    %v181 = vrot.slane %v176, %v180
    %v199 = vunpack.c.l.b16 %v160
    %v200 = vunpack.c.l.b16 %v161
    %v201 = vunpack.c.l.b16 %v162
    %v202 = vunpack.c.l.b16 %v163
    %v203 = vunpack.c.l.b16 %v164
    %v204 = vunpack.c.l.b16 %v165
    %v205 = vunpack.c.l.b16 %v166
    %v206 = vunpack.c.l.b16 %v167
    %v207 = vunpack.c.l.b16 %v168
    %v208 = vunpack.c.l.b16 %v169
    %v209 = vunpack.c.l.b16 %v170
    %v210 = vunpack.c.l.b16 %v171
    %v211 = vunpack.c.l.b16 %v172
    %v212 = vunpack.c.l.b16 %v173
    %v213 = vunpack.c.l.b16 %v174
    %v214 = vunpack.c.l.b16 %v175
    %v215 = vpack.c.b16 %v200, %v199
    %v216 = vpack.c.b16 %v202, %v201
    %v217 = vpack.c.b16 %v204, %v203
    %v218 = vpack.c.b16 %v206, %v205
    %v219 = vpack.c.b16 %v208, %v207
    %v220 = vpack.c.b16 %v210, %v209
    %v221 = vpack.c.b16 %v212, %v211
    %v222 = vpack.c.b16 %v214, %v213
    %231 = vmatprep.subr.bf16.mxu0 0
    %232 = vmatpush1.bf16.msra.mxu0 %v215
    %233 = vmatprep.subr.bf16.mxu0 0
    %234 = vmatpush1.bf16.msra.mxu0 %v216
    %235 = vmatprep.subr.bf16.mxu0 0
    %236 = vmatpush1.bf16.msra.mxu0 %v217
    %237 = vmatprep.subr.bf16.mxu0 0
    %238 = vmatpush1.bf16.msra.mxu0 %v218
    %239 = vmatprep.subr.bf16.mxu0 0
    %240 = vmatpush1.bf16.msra.mxu0 %v219
    %241 = vmatprep.subr.bf16.mxu0 0
    %242 = vmatpush1.bf16.msra.mxu0 %v220
    %243 = vmatprep.subr.bf16.mxu0 0
    %244 = vmatpush1.bf16.msra.mxu0 %v221
    %245 = vmatprep.subr.bf16.mxu0 0
    %246 = vmatpush1.bf16.msra.mxu0 %v222
    %247 = vmatprep.subr.bf16.mxu0 0
    %248 = vmatpush1.bf16.msra.mxu0 0
    %249 = vmatprep.subr.bf16.mxu0 0
    %250 = vmatpush1.bf16.msra.mxu0 0
    %251 = vmatprep.subr.bf16.mxu0 0
    %252 = vmatpush1.bf16.msra.mxu0 0
    %253 = vmatprep.subr.bf16.mxu0 0
    %254 = vmatpush1.bf16.msra.mxu0 0
    %255 = vmatprep.subr.bf16.mxu0 0
    %256 = vmatpush1.bf16.msra.mxu0 0
    %257 = vmatprep.subr.bf16.mxu0 0
    %258 = vmatpush1.bf16.msra.mxu0 0
    %259 = vmatprep.subr.bf16.mxu0 0
    %260 = vmatpush1.bf16.msra.mxu0 0
    %261 = vmatprep.subr.bf16.mxu0 0
    %262 = vmatpush1.bf16.msra.mxu0 0
    %263 = vmatprep.mubr.bf16.mxu0 0
    %264 = vmatmul.mubr.bf16.gmra.mrb[0].mxu0 %v159
    %v265 = vpop.f32.mrb[0].mxu0
    %v266 = vadd.f32 %v181, %v265
    %v267 = vpop.f32.mrb[0].mxu0
    %v268 = vpop.f32.mrb[0].mxu0
    %v269 = vadd.f32 %v181, %v268
    %v270 = vpop.f32.mrb[0].mxu0
    %271 = vdwg.mxu0
    %272 = vst.msk [vmem:[#allocation11] sm:$0xff] %vm112, %v266
    %273 = vst.msk [vmem:[#allocation11 + $0x8] sm:$0xff] %vm112, %v269
    // Predicated region
    $region42: #{ffn_forward.1} parent=1 // pred_check
      _
    $region43: #{ffn_forward.1} parent=1 // pred_check_branch
      %275 = sbr.rel (0) target = $region45
    $region44: #{ffn_forward.1} parent=1 // pred_region
      %s277 = ssub.s32 256, 256
      %278 = vsyncadd [#allocation4], %s277
      %s279 = sshll.u32 [#allocation11], 4
      %s280 = int_to_ptr.vmem [resolvable:$true] %s279
      %285 = dma.vmem_to_hbm [thread:$0]  %s280, 256, %s5, [#allocation4], 128, 128, 8
    $region45: #{ffn_forward.1} parent=1 // pred_fallthru
      _
    // Predicated region
    $region46: #{ffn_forward.1} parent=1 // pred_check
      _
    $region47: #{ffn_forward.1} parent=1 // pred_check_branch
      %287 = sbr.rel (0) target = $region49
    $region48: #{ffn_forward.1} parent=1 // pred_region
      %288 = dma.done [#allocation4], 256
    $region49: #{ffn_forward.1} parent=1 // pred_fallthru
      _
    %289 = vsyncpa [#allocation3], 1
    %290 = vsyncpa [#allocation6], 1
    %291 = vsyncpa [#allocation9], 1
    %292 = vsyncpa [#allocation4], 1

</llo_original>
